<compile_context>
chip_gen: v6e
topology: v6e:2x2x1
jax: 0.10.0
libtpu: 0.0.40
codegen_flags: <defaults>
</compile_context>

<pallas_src>
import functools

import jax
import jax.numpy as jnp
from jax import lax
from jax.experimental import pallas as pl
from jax.experimental.pallas import tpu as pltpu


def _data_condition_kernel(x_ref, y_ref, w1t_ref, b1t_ref, w2t_ref, b2t_ref,
                           part_ref, *, norm, m_valid, tile_n, apply_mask):
    t = pl.program_id(0)

    x = x_ref[...]                       # [D_in, tile_N]   (lane-dense rows)
    w1t = w1t_ref[...]                   # [H, D_in]
    d_in = x.shape[0]

    # ---- layer 1: shallow contraction on the VPU (broadcast FMA) ----------
    if d_in <= 8:
        z = w1t[:, 0:1] * x[0:1, :]
        for k in range(1, d_in):
            z = z + w1t[:, k:k + 1] * x[k:k + 1, :]
    else:
        z = jnp.dot(w1t, x, preferred_element_type=jnp.float32)
    h = jnp.tanh(z + b1t_ref[...])       # [H, tile_N]  (EUP tanh, f32)

    # ---- layer 2: K=H contraction on the MXU (idle unit, frees VALU/XLU) --
    pred = jnp.dot(w2t_ref[...], h,
                   preferred_element_type=jnp.float32) + b2t_ref[...]
    # _compute_dist: a = |module(x) - y|
    a = jnp.abs(pred - y_ref[...])       # [D_out, tile_N]

    if norm == 'inf':
        p = a
    elif norm == 2:
        p = jnp.square(a)                # VALU multiply, not exp(log(.))
    elif isinstance(norm, int):
        p = lax.integer_pow(a, norm)
    else:
        p = a ** norm

    if apply_mask:
        col = lax.broadcasted_iota(jnp.int32, p.shape, 1) + t * tile_n
        p = jnp.where(col < m_valid, p, 0.0)

    # ---- lane-dense per-tile partial; final scalar reduce is in wrapper ---
    num_groups = tile_n // 128
    acc = p[:, 0:128]
    if norm == 'inf':
        for g in range(1, num_groups):
            acc = jnp.maximum(acc, p[:, g * 128:(g + 1) * 128])
        part_ref[...] = jnp.max(acc, axis=0, keepdims=True)      # (1, 128)
    else:
        for g in range(1, num_groups):
            acc = acc + p[:, g * 128:(g + 1) * 128]
        part_ref[...] = jnp.sum(acc, axis=0, keepdims=True)      # (1, 128)


_MAX_TILE_N = 4096   # rows per tile; fits default scoped VMEM on v5e/v6e/v7x


@functools.partial(jax.jit, static_argnames=("norm",))
def _fused_loss(x, y, w1, b1, w2, b2, *, norm):
    """Flattened data [M, D_in]/[M, D_out] -> scalar loss (single pallas_call)."""
    m, d_in = x.shape
    d_out = y.shape[1]
    h_dim = w1.shape[1]
    f32 = jnp.float32

    m128 = pl.cdiv(m, 128) * 128
    tile_n = min(_MAX_TILE_N, m128)
    m_pad = pl.cdiv(m, tile_n) * tile_n
    num_tiles = m_pad // tile_n

    # feature-major, lane-dense layouts (cheap XLA transposes in the wrapper)
    x_t = jnp.pad(x.astype(f32), ((0, m_pad - m), (0, 0))).T     # [D_in, m_pad]
    y_t = jnp.pad(y.astype(f32), ((0, m_pad - m), (0, 0))).T     # [D_out, m_pad]
    w1t = w1.astype(f32).T                                       # [H, D_in]
    b1t = b1.astype(f32).reshape(1, h_dim).T                     # [H, 1]
    w2t = w2.astype(f32).T                                       # [D_out, H]
    b2t = b2.astype(f32).reshape(1, d_out).T                     # [D_out, 1]

    kernel = functools.partial(_data_condition_kernel, norm=norm,
                               m_valid=m, tile_n=tile_n,
                               apply_mask=(m_pad != m))
    partials = pl.pallas_call(
        kernel,
        out_shape=jax.ShapeDtypeStruct((num_tiles, 1, 128), jnp.float32),
        grid_spec=pltpu.PrefetchScalarGridSpec(
            num_scalar_prefetch=0,
            grid=(num_tiles,),
            in_specs=[
                pl.BlockSpec((d_in, tile_n), lambda t: (0, t)),
                pl.BlockSpec((d_out, tile_n), lambda t: (0, t)),
                # constant index maps -> weights stay VMEM-resident across grid
                pl.BlockSpec((h_dim, d_in), lambda t: (0, 0)),
                pl.BlockSpec((h_dim, 1), lambda t: (0, 0)),
                pl.BlockSpec((d_out, h_dim), lambda t: (0, 0)),
                pl.BlockSpec((d_out, 1), lambda t: (0, 0)),
            ],
            out_specs=pl.BlockSpec((None, 1, 128), lambda t: (t, 0, 0)),
        ),
        compiler_params=pltpu.CompilerParams(
            dimension_semantics=("parallel",)),   # independent tiles (v7x: 2 TCs)
    )(x_t, y_t, w1t, b1t, w2t, b2t)

    if norm == 'inf':
        return jnp.max(partials)
    # flattened mean == sum_b mean_b / B for equal-size batches
    return jnp.sum(partials) / (m * d_out)


class DataConditionPallas:
    """JAX/Pallas equivalent of torchphysics DataCondition (forward only)."""

    def __init__(self, params, dataloader, norm, use_full_dataset=False,
                 name='datacondition', weight=1.0):
        self.params = params            # (w1, b1, w2, b2) of the fitted module
        self.dataloader = dataloader    # sequence of (x, y) batches (equal sizes)
        self.norm = norm
        self.use_full_dataset = use_full_dataset
        self.name = name
        self.weight = weight            # applied externally during training
        self._iterator = None
        self._flat = None

    def _flat_data(self):
        if self._flat is None:
            xs, ys = zip(*self.dataloader)
            self._flat = (jnp.concatenate(xs, axis=0),
                          jnp.concatenate(ys, axis=0))
        return self._flat

    def forward(self):
        w1, b1, w2, b2 = self.params
        if self.use_full_dataset:
            # NOTE: flattening matches torchphysics' sum_b mean_b / B exactly
            # only for equal-size batches (same assumption as before).
            x_all, y_all = self._flat_data()
            return _fused_loss(x_all, y_all, w1, b1, w2, b2, norm=self.norm)
        # single-iteration path with a persistent iterator
        # TODO(synk): torch DataLoader shuffling/collation has no Pallas
        # equivalent; batches are plain (x, y) jnp arrays here.
        try:
            batch = next(self._iterator)
        except (StopIteration, TypeError):
            self._iterator = iter(self.dataloader)
            batch = next(self._iterator)
        x, y = batch
        return _fused_loss(x, y, w1, b1, w2, b2, norm=self.norm)


if __name__ == "__main__":
    key = jax.random.PRNGKey(0)
    N, D_IN, H, D_OUT = 64, 2, 128, 1
    NUM_BATCHES = 3

    k_w1, k_b1, k_w2, k_b2, k_data = jax.random.split(key, 5)
    w1 = jax.random.normal(k_w1, (D_IN, H), jnp.float32) * 0.5
    b1 = jax.random.normal(k_b1, (1, H), jnp.float32) * 0.1
    w2 = jax.random.normal(k_w2, (H, D_OUT), jnp.float32) * 0.5
    b2 = jax.random.normal(k_b2, (1, D_OUT), jnp.float32) * 0.1
    params = (w1, b1, w2, b2)

    # synthetic dataloader: list of (x, y) point batches
    dataloader = []
    for _ in range(NUM_BATCHES):
        kx, ky, k_data = jax.random.split(k_data, 3)
        x = jax.random.uniform(kx, (N, D_IN), jnp.float32)
        y = jax.random.normal(ky, (N, D_OUT), jnp.float32)
        dataloader.append((x, y))

    def reference_batch_loss(x, y, norm):
        pred = jnp.tanh(x @ w1 + b1) @ w2 + b2
        a = jnp.abs(pred - y)
        return jnp.max(a) if norm == 'inf' else jnp.mean(a ** norm)

    # single iteration, L2-style norm
    cond = DataConditionPallas(params, dataloader, norm=2,
                               use_full_dataset=False)
    loss_single = jax.block_until_ready(cond.forward())

    # full-dataset mean accumulation (single fused kernel over all batches)
    cond_full = DataConditionPallas(params, dataloader, norm=2,
                                    use_full_dataset=True)
    loss_full = jax.block_until_ready(cond_full.forward())

    # full-dataset inf-norm (maximum error)
    cond_inf = DataConditionPallas(params, dataloader, norm='inf',
                                   use_full_dataset=True)
    loss_inf = jax.block_until_ready(cond_inf.forward())

    # full-dataset odd integer norm (exercises the lax.integer_pow path)
    cond_p3 = DataConditionPallas(params, dataloader, norm=3,
                                  use_full_dataset=True)
    loss_p3 = jax.block_until_ready(cond_p3.forward())

    # correctness vs. pure-JAX reference
    ref_single = reference_batch_loss(*dataloader[0], 2)
    ref_full = sum(reference_batch_loss(x, y, 2) for x, y in dataloader) / NUM_BATCHES
    ref_inf = functools.reduce(
        jnp.maximum, (reference_batch_loss(x, y, 'inf') for x, y in dataloader))
    ref_p3 = sum(reference_batch_loss(x, y, 3) for x, y in dataloader) / NUM_BATCHES

    assert jnp.allclose(loss_single, ref_single, rtol=1e-5, atol=1e-5)
    assert jnp.allclose(loss_full, ref_full, rtol=1e-5, atol=1e-5)
    assert jnp.allclose(loss_inf, ref_inf, rtol=1e-5, atol=1e-5)
    assert jnp.allclose(loss_p3, ref_p3, rtol=1e-5, atol=1e-5)

    print("KERNEL_OK")
</pallas_src>

<mosaic_0001>
module attributes {stable_mosaic.version = 11 : i64} {
  func.func @_data_condition_kernel(%arg0: i32, %arg1: memref<2x128xf32, #tpu.memory_space<vmem>>, %arg2: memref<1x128xf32, #tpu.memory_space<vmem>>, %arg3: memref<128x2xf32, #tpu.memory_space<vmem>>, %arg4: memref<128x1xf32, #tpu.memory_space<vmem>>, %arg5: memref<1x128xf32, #tpu.memory_space<vmem>>, %arg6: memref<1x1xf32, #tpu.memory_space<vmem>>, %arg7: memref<1x1x128xf32, #tpu.memory_space<vmem>>) attributes {dimension_semantics = [#tpu.dimension_semantics<parallel>], iteration_bounds = array<i64: 1>, scalar_prefetch = 0 : i64, scratch_operands = 0 : i64, tpu.core_type = #tpu.core_type<tc>, window_params = [{transform_indices = @transform_0, window_bounds = array<i64: 2, 128>}, {transform_indices = @transform_1, window_bounds = array<i64: 1, 128>}, {pipeline_mode = #tpu.pipeline_mode<synchronous>, transform_indices = @transform_2, window_bounds = array<i64: 128, 2>}, {pipeline_mode = #tpu.pipeline_mode<synchronous>, transform_indices = @transform_3, window_bounds = array<i64: 128, 1>}, {pipeline_mode = #tpu.pipeline_mode<synchronous>, transform_indices = @transform_4, window_bounds = array<i64: 1, 128>}, {pipeline_mode = #tpu.pipeline_mode<synchronous>, transform_indices = @transform_5, window_bounds = array<i64: 1, 1>}, {transform_indices = @transform_6, window_bounds = array<i64: 1, 1, 128>}]} {
    %c0 = arith.constant 0 : index
    %c0_0 = arith.constant 0 : index
    %0 = vector.load %arg1[%c0, %c0_0] : memref<2x128xf32, #tpu.memory_space<vmem>>, vector<2x128xf32>
    %c0_1 = arith.constant 0 : index
    %c0_2 = arith.constant 0 : index
    %1 = vector.load %arg3[%c0_1, %c0_2] : memref<128x2xf32, #tpu.memory_space<vmem>>, vector<128x2xf32>
    %2 = vector.extract_strided_slice %1 {offsets = [0, 0], sizes = [128, 1], strides = [1, 1]} : vector<128x2xf32> to vector<128x1xf32>
    %3 = vector.extract_strided_slice %0 {offsets = [0, 0], sizes = [1, 128], strides = [1, 1]} : vector<2x128xf32> to vector<1x128xf32>
    %4 = vector.broadcast %2 : vector<128x1xf32> to vector<128x128xf32>
    %5 = vector.broadcast %3 : vector<1x128xf32> to vector<128x128xf32>
    %6 = arith.mulf %4, %5 : vector<128x128xf32>
    %7 = vector.extract_strided_slice %1 {offsets = [0, 1], sizes = [128, 1], strides = [1, 1]} : vector<128x2xf32> to vector<128x1xf32>
    %8 = vector.extract_strided_slice %0 {offsets = [1, 0], sizes = [1, 128], strides = [1, 1]} : vector<2x128xf32> to vector<1x128xf32>
    %9 = vector.broadcast %7 : vector<128x1xf32> to vector<128x128xf32>
    %10 = vector.broadcast %8 : vector<1x128xf32> to vector<128x128xf32>
    %11 = arith.mulf %9, %10 : vector<128x128xf32>
    %12 = arith.addf %6, %11 : vector<128x128xf32>
    %c0_3 = arith.constant 0 : index
    %c0_4 = arith.constant 0 : index
    %13 = vector.load %arg4[%c0_3, %c0_4] : memref<128x1xf32, #tpu.memory_space<vmem>>, vector<128x1xf32>
    %14 = vector.broadcast %13 : vector<128x1xf32> to vector<128x128xf32>
    %15 = arith.addf %12, %14 : vector<128x128xf32>
    %16 = math.tanh %15 : vector<128x128xf32>
    %c0_5 = arith.constant 0 : index
    %c0_6 = arith.constant 0 : index
    %17 = vector.load %arg5[%c0_5, %c0_6] : memref<1x128xf32, #tpu.memory_space<vmem>>, vector<1x128xf32>
    %cst = arith.constant dense<0.000000e+00> : vector<1x128xf32>
    %18 = tpu.matmul %17, %16, %cst {dimension_numbers = #tpu.dot_dimension_numbers<[1], [0], [0], [1], [0, 0, 1, 1], [], []>} : vector<1x128xf32>, vector<128x128xf32>, vector<1x128xf32> -> vector<1x128xf32>
    %c0_7 = arith.constant 0 : index
    %c0_8 = arith.constant 0 : index
    %19 = vector.load %arg6[%c0_7, %c0_8] : memref<1x1xf32, #tpu.memory_space<vmem>>, vector<1x1xf32>
    %20 = vector.broadcast %19 : vector<1x1xf32> to vector<1x128xf32>
    %21 = arith.addf %18, %20 : vector<1x128xf32>
    %c0_9 = arith.constant 0 : index
    %c0_10 = arith.constant 0 : index
    %22 = vector.load %arg2[%c0_9, %c0_10] : memref<1x128xf32, #tpu.memory_space<vmem>>, vector<1x128xf32>
    %23 = arith.subf %21, %22 : vector<1x128xf32>
    %24 = math.absf %23 : vector<1x128xf32>
    %25 = arith.mulf %24, %24 : vector<1x128xf32>
    %26 = tpu.iota {dimensions = array<i32: 1>} : vector<1x128xi32>
    %c128_i32 = arith.constant 128 : i32
    %27 = arith.muli %arg0, %c128_i32 : i32
    %28 = vector.broadcast %27 : i32 to vector<1x128xi32>
    %29 = arith.addi %26, %28 : vector<1x128xi32>
    %c64_i32 = arith.constant 64 : i32
    %30 = vector.broadcast %c64_i32 : i32 to vector<1x128xi32>
    %31 = arith.cmpi slt, %29, %30 : vector<1x128xi32>
    %cst_11 = arith.constant 0.000000e+00 : f32
    %32 = vector.broadcast %cst_11 : f32 to vector<1x128xf32>
    %33 = arith.select %31, %25, %32 : vector<1x128xi1>, vector<1x128xf32>
    %cst_12 = arith.constant dense<0.000000e+00> : vector<128xf32>
    %34 = vector.multi_reduction <add>, %33, %cst_12 [0] : vector<1x128xf32> to vector<128xf32>
    %35 = vector.shape_cast %34 : vector<128xf32> to vector<1x128xf32>
    %c0_13 = arith.constant 0 : index
    %c0_14 = arith.constant 0 : index
    %c0_15 = arith.constant 0 : index
    %36 = vector.load %arg7[%c0_13, %c0_14, %c0_15] : memref<1x1x128xf32, #tpu.memory_space<vmem>>, vector<1x1x128xf32>
    %37 = vector.shape_cast %36 : vector<1x1x128xf32> to vector<1x128xf32>
    %38 = vector.shape_cast %35 : vector<1x128xf32> to vector<1x1x128xf32>
    tpu.vector_store %arg7[%c0_13, %c0_14, %c0_15], %38 {strides = array<i32>} : memref<1x1x128xf32, #tpu.memory_space<vmem>>, vector<1x1x128xf32>,
    return
  }
  func.func @transform_0(%arg0: i32) -> (i32, i32) {
    %c0_i32 = arith.constant 0 : i32
    %c0_i32_0 = arith.constant 0 : i32
    return %c0_i32, %arg0 : i32, i32
  }
  func.func @transform_1(%arg0: i32) -> (i32, i32) {
    %c0_i32 = arith.constant 0 : i32
    %c0_i32_0 = arith.constant 0 : i32
    return %c0_i32, %arg0 : i32, i32
  }
  func.func @transform_2(%arg0: i32) -> (i32, i32) {
    %c0_i32 = arith.constant 0 : i32
    %c0_i32_0 = arith.constant 0 : i32
    %c0_i32_1 = arith.constant 0 : i32
    return %c0_i32, %c0_i32_0 : i32, i32
  }
  func.func @transform_3(%arg0: i32) -> (i32, i32) {
    %c0_i32 = arith.constant 0 : i32
    %c0_i32_0 = arith.constant 0 : i32
    %c0_i32_1 = arith.constant 0 : i32
    return %c0_i32, %c0_i32_0 : i32, i32
  }
  func.func @transform_4(%arg0: i32) -> (i32, i32) {
    %c0_i32 = arith.constant 0 : i32
    %c0_i32_0 = arith.constant 0 : i32
    %c0_i32_1 = arith.constant 0 : i32
    return %c0_i32, %c0_i32_0 : i32, i32
  }
  func.func @transform_5(%arg0: i32) -> (i32, i32) {
    %c0_i32 = arith.constant 0 : i32
    %c0_i32_0 = arith.constant 0 : i32
    %c0_i32_1 = arith.constant 0 : i32
    return %c0_i32, %c0_i32_0 : i32, i32
  }
  func.func @transform_6(%arg0: i32) -> (i32, i32, i32) {
    %c0_i32 = arith.constant 0 : i32
    %c0_i32_0 = arith.constant 0 : i32
    %c0_i32_1 = arith.constant 0 : i32
    return %arg0, %c0_i32, %c0_i32_0 : i32, i32, i32
  }
}

</mosaic_0001>

<llo_original>
// kernel: _fused_loss.1
$region0: #{_fused_loss.1}
  #allocation0 [shape = 'u32[]', space=smem, size = 0x4, offset = 0x4, fixed_abs, tag = 'smem constant byte address 0x4 - core index']
  #allocation1 [shape = 'u32[144,128]{1,0:T(1,128)}', space=vmem, size = 0x12000, scoped, tag = 'internal scratch']
  #allocation2 [shape = 'f32[1,1]{1,0:T(1,128)S(1)}', space=vmem, size = 0x200, scoped, tag = 'scoped memory for _fused_loss.1']
  %s0 = inlined_call_operand.vmem [shape: f32[2,128], index: 0, kind: input, shape index: {}]
  %s1 = inlined_call_operand.vmem [shape: f32[1,128], index: 1, kind: input, shape index: {}]
  %s2 = inlined_call_operand.vmem [shape: f32[128,2], index: 2, kind: input, shape index: {}]
  %s3 = inlined_call_operand.vmem [shape: f32[128,1], index: 3, kind: input, shape index: {}]
  %s4 = inlined_call_operand.vmem [shape: f32[1,128], index: 4, kind: input, shape index: {}]
  %s5 = inlined_call_operand.<no memory space> [shape: f32[1,1], index: 5, kind: input, shape index: {}]
  %s6 = inlined_call_operand.vmem [shape: f32[1,1,128], index: 6, kind: output, shape index: {}]
  %s7 = sld [smem:[#allocation0]]
  $region34: #{_fused_loss.1} parent=0
    _
  %s9 = ssub.s32 1, %s7
  %s10 = scalar_select 0, %s9, %s7
  %v11 = vstv %s5
  %12 = vst [vmem:[#allocation2] sm:$0x1] %v11
  // Predicated region
  $region2: #{_fused_loss.1} parent=0 // pred_check
    _
  $region3: #{_fused_loss.1} parent=0 // pred_check_branch
    %14 = sbr.rel (0) target = $region5
  $region4: #{_fused_loss.1} parent=0 // pred_region
    _
  $region5: #{_fused_loss.1} parent=0 // pred_fallthru
    _
  // Predicated region
  $region6: #{_fused_loss.1} parent=0 // pred_check
    _
  $region7: #{_fused_loss.1} parent=0 // pred_check_branch
    %16 = sbr.rel (0) target = $region9
  $region8: #{_fused_loss.1} parent=0 // pred_region
    _
  $region9: #{_fused_loss.1} parent=0 // pred_fallthru
    _
  // Predicated region
  $region10: #{_fused_loss.1} parent=0 // pred_check
    _
  $region11: #{_fused_loss.1} parent=0 // pred_check_branch
    %18 = sbr.rel (0) target = $region13
  $region12: #{_fused_loss.1} parent=0 // pred_region
    _
  $region13: #{_fused_loss.1} parent=0 // pred_fallthru
    _
  // Predicated region
  $region14: #{_fused_loss.1} parent=0 // pred_check
    _
  $region15: #{_fused_loss.1} parent=0 // pred_check_branch
    %20 = sbr.rel (0) target = $region17
  $region16: #{_fused_loss.1} parent=0 // pred_region
    _
  $region17: #{_fused_loss.1} parent=0 // pred_fallthru
    _
  // Predicated region
  $region18: #{_fused_loss.1} parent=0 // pred_check
    _
  $region19: #{_fused_loss.1} parent=0 // pred_check_branch
    %22 = sbr.rel (0) target = $region21
  $region20: #{_fused_loss.1} parent=0 // pred_region
    _
  $region21: #{_fused_loss.1} parent=0 // pred_fallthru
    _
  // Predicated region
  $region22: #{_fused_loss.1} parent=0 // pred_check
    _
  $region23: #{_fused_loss.1} parent=0 // pred_check_branch
    %24 = sbr.rel (0) target = $region25
  $region24: #{_fused_loss.1} parent=0 // pred_region
    _
  $region25: #{_fused_loss.1} parent=0 // pred_fallthru
    _
  %v25 = vld [vmem:[%s0] sm:$0x3]
  %v26 = vld [vmem:[%s2] sm:$0xff]
  %v27 = vld [vmem:[%s2 + $0x8] sm:$0xff]
  %v28 = vld [vmem:[%s2 + $0x10] sm:$0xff]
  %v29 = vld [vmem:[%s2 + $0x18] sm:$0xff]
  %v30 = vld [vmem:[%s2 + $0x20] sm:$0xff]
  %v31 = vld [vmem:[%s2 + $0x28] sm:$0xff]
  %v32 = vld [vmem:[%s2 + $0x30] sm:$0xff]
  %v33 = vld [vmem:[%s2 + $0x38] sm:$0xff]
  %v34 = vld [vmem:[%s2 + $0x40] sm:$0xff]
  %v35 = vld [vmem:[%s2 + $0x48] sm:$0xff]
  %v36 = vld [vmem:[%s2 + $0x50] sm:$0xff]
  %v37 = vld [vmem:[%s2 + $0x58] sm:$0xff]
  %v38 = vld [vmem:[%s2 + $0x60] sm:$0xff]
  %v39 = vld [vmem:[%s2 + $0x68] sm:$0xff]
  %v40 = vld [vmem:[%s2 + $0x70] sm:$0xff]
  %v41 = vld [vmem:[%s2 + $0x78] sm:$0xff]
  %43 = vset.pattern.permute.xlu0 0
  %44 = vperm.xlu0 %43, %v26
  %v45 = vpop.permute.xlu0 %44
  %48 = vset.pattern.permute.xlu0 0
  %49 = vperm.xlu0 %48, %v27
  %v50 = vpop.permute.xlu0 %49
  %53 = vset.pattern.permute.xlu0 0
  %54 = vperm.xlu0 %53, %v28
  %v55 = vpop.permute.xlu0 %54
  %58 = vset.pattern.permute.xlu0 0
  %59 = vperm.xlu0 %58, %v29
  %v60 = vpop.permute.xlu0 %59
  %63 = vset.pattern.permute.xlu0 0
  %64 = vperm.xlu0 %63, %v30
  %v65 = vpop.permute.xlu0 %64
  %68 = vset.pattern.permute.xlu0 0
  %69 = vperm.xlu0 %68, %v31
  %v70 = vpop.permute.xlu0 %69
  %73 = vset.pattern.permute.xlu0 0
  %74 = vperm.xlu0 %73, %v32
  %v75 = vpop.permute.xlu0 %74
  %78 = vset.pattern.permute.xlu0 0
  %79 = vperm.xlu0 %78, %v33
  %v80 = vpop.permute.xlu0 %79
  %83 = vset.pattern.permute.xlu0 0
  %84 = vperm.xlu0 %83, %v34
  %v85 = vpop.permute.xlu0 %84
  %88 = vset.pattern.permute.xlu0 0
  %89 = vperm.xlu0 %88, %v35
  %v90 = vpop.permute.xlu0 %89
  %93 = vset.pattern.permute.xlu0 0
  %94 = vperm.xlu0 %93, %v36
  %v95 = vpop.permute.xlu0 %94
  %98 = vset.pattern.permute.xlu0 0
  %99 = vperm.xlu0 %98, %v37
  %v100 = vpop.permute.xlu0 %99
  %103 = vset.pattern.permute.xlu0 0
  %104 = vperm.xlu0 %103, %v38
  %v105 = vpop.permute.xlu0 %104
  %108 = vset.pattern.permute.xlu0 0
  %109 = vperm.xlu0 %108, %v39
  %v110 = vpop.permute.xlu0 %109
  %113 = vset.pattern.permute.xlu0 0
  %114 = vperm.xlu0 %113, %v40
  %v115 = vpop.permute.xlu0 %114
  %118 = vset.pattern.permute.xlu0 0
  %119 = vperm.xlu0 %118, %v41
  %v120 = vpop.permute.xlu0 %119
  %v122 = vlaneseq
  %v123 = vshrl.u32 %v122, 7
  %v124 = vsub.s32 0, %v123
  %v125 = vrot.slane %v25, %v124
  %v126 = vmul.f32 %v45, %v125
  %v127 = vmul.f32 %v50, %v125
  %v128 = vmul.f32 %v55, %v125
  %v129 = vmul.f32 %v60, %v125
  %v130 = vmul.f32 %v65, %v125
  %v131 = vmul.f32 %v70, %v125
  %v132 = vmul.f32 %v75, %v125
  %v133 = vmul.f32 %v80, %v125
  %v134 = vmul.f32 %v85, %v125
  %v135 = vmul.f32 %v90, %v125
  %v136 = vmul.f32 %v95, %v125
  %v137 = vmul.f32 %v100, %v125
  %v138 = vmul.f32 %v105, %v125
  %v139 = vmul.f32 %v110, %v125
  %v140 = vmul.f32 %v115, %v125
  %v141 = vmul.f32 %v120, %v125
  %142 = vset.pattern.permute.xlu0 1
  %143 = vperm.xlu0 %142, %v26
  %v144 = vpop.permute.xlu0 %143
  %146 = vset.pattern.permute.xlu0 1
  %147 = vperm.xlu0 %146, %v27
  %v148 = vpop.permute.xlu0 %147
  %150 = vset.pattern.permute.xlu0 1
  %151 = vperm.xlu0 %150, %v28
  %v152 = vpop.permute.xlu0 %151
  %154 = vset.pattern.permute.xlu0 1
  %155 = vperm.xlu0 %154, %v29
  %v156 = vpop.permute.xlu0 %155
  %158 = vset.pattern.permute.xlu0 1
  %159 = vperm.xlu0 %158, %v30
  %v160 = vpop.permute.xlu0 %159
  %162 = vset.pattern.permute.xlu0 1
  %163 = vperm.xlu0 %162, %v31
  %v164 = vpop.permute.xlu0 %163
  %166 = vset.pattern.permute.xlu0 1
  %167 = vperm.xlu0 %166, %v32
  %v168 = vpop.permute.xlu0 %167
  %170 = vset.pattern.permute.xlu0 1
  %171 = vperm.xlu0 %170, %v33
  %v172 = vpop.permute.xlu0 %171
  %174 = vset.pattern.permute.xlu0 1
  %175 = vperm.xlu0 %174, %v34
  %v176 = vpop.permute.xlu0 %175
  %178 = vset.pattern.permute.xlu0 1
  %179 = vperm.xlu0 %178, %v35
  %v180 = vpop.permute.xlu0 %179
  %182 = vset.pattern.permute.xlu0 1
  %183 = vperm.xlu0 %182, %v36
  %v184 = vpop.permute.xlu0 %183
  %186 = vset.pattern.permute.xlu0 1
  %187 = vperm.xlu0 %186, %v37
  %v188 = vpop.permute.xlu0 %187
  %190 = vset.pattern.permute.xlu0 1
  %191 = vperm.xlu0 %190, %v38
  %v192 = vpop.permute.xlu0 %191
  %194 = vset.pattern.permute.xlu0 1
  %195 = vperm.xlu0 %194, %v39
  %v196 = vpop.permute.xlu0 %195
  %198 = vset.pattern.permute.xlu0 1
  %199 = vperm.xlu0 %198, %v40
  %v200 = vpop.permute.xlu0 %199
  %202 = vset.pattern.permute.xlu0 1
  %203 = vperm.xlu0 %202, %v41
  %v204 = vpop.permute.xlu0 %203
  %v206 = vlaneseq
  %v207 = vshrl.u32 %v206, 7
  %v208 = vsub.s32 1, %v207
  %v209 = vrot.slane %v25, %v208
  %v210 = vmul.f32 %v144, %v209
  %v211 = vmul.f32 %v148, %v209
  %v212 = vmul.f32 %v152, %v209
  %v213 = vmul.f32 %v156, %v209
  %v214 = vmul.f32 %v160, %v209
  %v215 = vmul.f32 %v164, %v209
  %v216 = vmul.f32 %v168, %v209
  %v217 = vmul.f32 %v172, %v209
  %v218 = vmul.f32 %v176, %v209
  %v219 = vmul.f32 %v180, %v209
  %v220 = vmul.f32 %v184, %v209
  %v221 = vmul.f32 %v188, %v209
  %v222 = vmul.f32 %v192, %v209
  %v223 = vmul.f32 %v196, %v209
  %v224 = vmul.f32 %v200, %v209
  %v225 = vmul.f32 %v204, %v209
  %v226 = vadd.f32 %v126, %v210
  %v227 = vadd.f32 %v127, %v211
  %v228 = vadd.f32 %v128, %v212
  %v229 = vadd.f32 %v129, %v213
  %v230 = vadd.f32 %v130, %v214
  %v231 = vadd.f32 %v131, %v215
  %v232 = vadd.f32 %v132, %v216
  %v233 = vadd.f32 %v133, %v217
  %v234 = vadd.f32 %v134, %v218
  %v235 = vadd.f32 %v135, %v219
  %v236 = vadd.f32 %v136, %v220
  %v237 = vadd.f32 %v137, %v221
  %v238 = vadd.f32 %v138, %v222
  %v239 = vadd.f32 %v139, %v223
  %v240 = vadd.f32 %v140, %v224
  %v241 = vadd.f32 %v141, %v225
  %v242 = vld [vmem:[%s3] sm:$0xff]
  %v243 = vld [vmem:[%s3 + $0x8] sm:$0xff]
  %v244 = vld [vmem:[%s3 + $0x10] sm:$0xff]
  %v245 = vld [vmem:[%s3 + $0x18] sm:$0xff]
  %v246 = vld [vmem:[%s3 + $0x20] sm:$0xff]
  %v247 = vld [vmem:[%s3 + $0x28] sm:$0xff]
  %v248 = vld [vmem:[%s3 + $0x30] sm:$0xff]
  %v249 = vld [vmem:[%s3 + $0x38] sm:$0xff]
  %v250 = vld [vmem:[%s3 + $0x40] sm:$0xff]
  %v251 = vld [vmem:[%s3 + $0x48] sm:$0xff]
  %v252 = vld [vmem:[%s3 + $0x50] sm:$0xff]
  %v253 = vld [vmem:[%s3 + $0x58] sm:$0xff]
  %v254 = vld [vmem:[%s3 + $0x60] sm:$0xff]
  %v255 = vld [vmem:[%s3 + $0x68] sm:$0xff]
  %v256 = vld [vmem:[%s3 + $0x70] sm:$0xff]
  %v257 = vld [vmem:[%s3 + $0x78] sm:$0xff]
  %259 = vset.pattern.permute.xlu0 0
  %260 = vperm.xlu0 %259, %v242
  %v261 = vpop.permute.xlu0 %260
  %264 = vset.pattern.permute.xlu0 0
  %265 = vperm.xlu0 %264, %v243
  %v266 = vpop.permute.xlu0 %265
  %269 = vset.pattern.permute.xlu0 0
  %270 = vperm.xlu0 %269, %v244
  %v271 = vpop.permute.xlu0 %270
  %274 = vset.pattern.permute.xlu0 0
  %275 = vperm.xlu0 %274, %v245
  %v276 = vpop.permute.xlu0 %275
  %279 = vset.pattern.permute.xlu0 0
  %280 = vperm.xlu0 %279, %v246
  %v281 = vpop.permute.xlu0 %280
  %284 = vset.pattern.permute.xlu0 0
  %285 = vperm.xlu0 %284, %v247
  %v286 = vpop.permute.xlu0 %285
  %289 = vset.pattern.permute.xlu0 0
  %290 = vperm.xlu0 %289, %v248
  %v291 = vpop.permute.xlu0 %290
  %294 = vset.pattern.permute.xlu0 0
  %295 = vperm.xlu0 %294, %v249
  %v296 = vpop.permute.xlu0 %295
  %299 = vset.pattern.permute.xlu0 0
  %300 = vperm.xlu0 %299, %v250
  %v301 = vpop.permute.xlu0 %300
  %304 = vset.pattern.permute.xlu0 0
  %305 = vperm.xlu0 %304, %v251
  %v306 = vpop.permute.xlu0 %305
  %309 = vset.pattern.permute.xlu0 0
  %310 = vperm.xlu0 %309, %v252
  %v311 = vpop.permute.xlu0 %310
  %314 = vset.pattern.permute.xlu0 0
  %315 = vperm.xlu0 %314, %v253
  %v316 = vpop.permute.xlu0 %315
  %319 = vset.pattern.permute.xlu0 0
  %320 = vperm.xlu0 %319, %v254
  %v321 = vpop.permute.xlu0 %320
  %324 = vset.pattern.permute.xlu0 0
  %325 = vperm.xlu0 %324, %v255
  %v326 = vpop.permute.xlu0 %325
  %329 = vset.pattern.permute.xlu0 0
  %330 = vperm.xlu0 %329, %v256
  %v331 = vpop.permute.xlu0 %330
  %334 = vset.pattern.permute.xlu0 0
  %335 = vperm.xlu0 %334, %v257
  %v336 = vpop.permute.xlu0 %335
  %v338 = vadd.f32 %v226, %v261
  %v339 = vadd.f32 %v227, %v266
  %v340 = vadd.f32 %v228, %v271
  %v341 = vadd.f32 %v229, %v276
  %v342 = vadd.f32 %v230, %v281
  %v343 = vadd.f32 %v231, %v286
  %v344 = vadd.f32 %v232, %v291
  %v345 = vadd.f32 %v233, %v296
  %v346 = vadd.f32 %v234, %v301
  %v347 = vadd.f32 %v235, %v306
  %v348 = vadd.f32 %v236, %v311
  %v349 = vadd.f32 %v237, %v316
  %v350 = vadd.f32 %v238, %v321
  %v351 = vadd.f32 %v239, %v326
  %v352 = vadd.f32 %v240, %v331
  %v353 = vadd.f32 %v241, %v336
  %v354 = vtanh.pop %v338
  %v355 = vtanh.pop %v339
  %v356 = vtanh.pop %v340
  %v357 = vtanh.pop %v341
  %v358 = vtanh.pop %v342
  %v359 = vtanh.pop %v343
  %v360 = vtanh.pop %v344
  %v361 = vtanh.pop %v345
  %v362 = vtanh.pop %v346
  %v363 = vtanh.pop %v347
  %v364 = vtanh.pop %v348
  %v365 = vtanh.pop %v349
  %v366 = vtanh.pop %v350
  %v367 = vtanh.pop %v351
  %v368 = vtanh.pop %v352
  %v369 = vtanh.pop %v353
  %v370 = vld [vmem:[%s4] sm:$0x1]
  %v371 = vld [vmem:[#allocation2] sm:$0x1]
  %373 = vset.pattern.permute.xlu0 0
  %374 = vperm.xlu0 %373, %v371
  %v375 = vpop.permute.xlu0 %374
  %v377 = vlaneseq
  %v378 = vshrl.u32 %v377, 7
  %v379 = vsub.s32 0, %v378
  %v380 = vrot.slane %v375, %v379
  %381 = vmatprep.subr.mxu0 0.0
  %382 = vmatpush1.msra.mxu0 %v369
  %383 = vmatprep.subr.mxu0 0.0
  %384 = vmatpush1.msra.mxu0 %v368
  %385 = vmatprep.subr.mxu0 0.0
  %386 = vmatpush1.msra.mxu0 %v367
  %387 = vmatprep.subr.mxu0 0.0
  %388 = vmatpush1.msra.mxu0 %v366
  %389 = vmatprep.subr.mxu0 0.0
  %390 = vmatpush1.msra.mxu0 %v365
  %391 = vmatprep.subr.mxu0 0.0
  %392 = vmatpush1.msra.mxu0 %v364
  %393 = vmatprep.subr.mxu0 0.0
  %394 = vmatpush1.msra.mxu0 %v363
  %395 = vmatprep.subr.mxu0 0.0
  %396 = vmatpush1.msra.mxu0 %v362
  %397 = vmatprep.subr.mxu0 0.0
  %398 = vmatpush1.msra.mxu0 %v361
  %399 = vmatprep.subr.mxu0 0.0
  %400 = vmatpush1.msra.mxu0 %v360
  %401 = vmatprep.subr.mxu0 0.0
  %402 = vmatpush1.msra.mxu0 %v359
  %403 = vmatprep.subr.mxu0 0.0
  %404 = vmatpush1.msra.mxu0 %v358
  %405 = vmatprep.subr.mxu0 0.0
  %406 = vmatpush1.msra.mxu0 %v357
  %407 = vmatprep.subr.mxu0 0.0
  %408 = vmatpush1.msra.mxu0 %v356
  %409 = vmatprep.subr.mxu0 0.0
  %410 = vmatpush1.msra.mxu0 %v355
  %411 = vmatprep.subr.mxu0 0.0
  %412 = vmatpush1.msra.mxu0 %v354
  %413 = vmatprep.subr.mxu0 0.0
  %414 = vmatpush2.msra.mxu0 0.0
  %415 = vmatprep.subr.mxu0 0.0
  %416 = vmatpush2.msra.mxu0 0.0
  %417 = vmatprep.subr.mxu0 0.0
  %418 = vmatpush2.msra.mxu0 0.0
  %419 = vmatprep.subr.mxu0 0.0
  %420 = vmatpush2.msra.mxu0 0.0
  %421 = vmatprep.subr.mxu0 0.0
  %422 = vmatpush2.msra.mxu0 0.0
  %423 = vmatprep.subr.mxu0 0.0
  %424 = vmatpush2.msra.mxu0 0.0
  %425 = vmatprep.subr.mxu0 0.0
  %426 = vmatpush2.msra.mxu0 0.0
  %427 = vmatprep.subr.mxu0 0.0
  %428 = vmatpush2.msra.mxu0 0.0
  %429 = vmatprep.subr.mxu0 0.0
  %430 = vmatpush2.msra.mxu0 0.0
  %431 = vmatprep.subr.mxu0 0.0
  %432 = vmatpush2.msra.mxu0 0.0
  %433 = vmatprep.subr.mxu0 0.0
  %434 = vmatpush2.msra.mxu0 0.0
  %435 = vmatprep.subr.mxu0 0.0
  %436 = vmatpush2.msra.mxu0 0.0
  %437 = vmatprep.subr.mxu0 0.0
  %438 = vmatpush2.msra.mxu0 0.0
  %439 = vmatprep.subr.mxu0 0.0
  %440 = vmatpush2.msra.mxu0 0.0
  %441 = vmatprep.subr.mxu0 0.0
  %442 = vmatpush2.msra.mxu0 0.0
  %443 = vmatprep.subr.mxu0 0.0
  %444 = vmatpush2.msra.mxu0 0.0
  %445 = vmatprep.mubr.f32.mxu0 0.0
  %446 = vmatmul.mubr.f32.gmra.mxu0 %v370
  %v447 = vpop.f32.mrf.mxu0
  %v448 = vadd.f32 %v380, %v447
  %v449 = vpop.f32.mrf.mxu0
  %450 = vdwg.mxu0
  %v451 = vld [vmem:[%s1] sm:$0x1]
  %v452 = vsub.f32 %v448, %v451
  %v453 = vand.u32 2147483647, %v452
  %v454 = vmul.f32 %v453, %v453
  %v455 = vlaneseq
  %v456 = vand.u32 %v455, 127
  %s457 = smul.u32 0, 128
  %v458 = vstv %s457
  %v459 = vadd.s32 %v456, %v458
  %vm460 = vcmp.lt.s32.totalorder %v459, 64
  %v461 = vsel %vm460, %v454, 0.0
  %v462 = vadd.f32 %v461, 0.0
  %463 = vst [vmem:[%s6] sm:$0x1] %v462
  // Predicated region
  $region26: #{_fused_loss.1} parent=0 // pred_check
    _
  $region27: #{_fused_loss.1} parent=0 // pred_check_branch
    %465 = sbr.rel (0) target = $region29
  $region28: #{_fused_loss.1} parent=0 // pred_region
    _
  $region29: #{_fused_loss.1} parent=0 // pred_fallthru
    _
  // Predicated region
  $region30: #{_fused_loss.1} parent=0 // pred_check
    _
  $region31: #{_fused_loss.1} parent=0 // pred_check_branch
    %467 = sbr.rel (0) target = $region33
  $region32: #{_fused_loss.1} parent=0 // pred_region
    _
  $region33: #{_fused_loss.1} parent=0 // pred_fallthru
    _

</llo_original>
